<compile_context>
chip_gen: v7x
topology: tpu7x:2x2x1
jax: 0.10.0
libtpu: 0.0.40
codegen_flags: <defaults>
</compile_context>

<pallas_src>
import math

import jax
import jax.numpy as jnp
from jax.experimental import pallas as pl
from jax.experimental.pallas import tpu as pltpu


def hmoe_kernel(x_ref, w_ref, b_ref, o_ref):
    """x_ref: (tm, PH); w_ref: (L, PH, PH); b_ref: (L, 1, PH); o_ref: (tm, PH)."""
    L = w_ref.shape[0]
    x0 = x_ref[...].astype(jnp.float32)

    def level_body(l, x):
        # One lane-dense MXU matmul per level (expert mean already folded in):
        # contract x dim 1 (in) with w dim 0 (in) -> (tm, PH).
        y = jax.lax.dot_general(
            x, w_ref[l],
            dimension_numbers=(((1,), (0,)), ((), ())),
            preferred_element_type=jnp.float32)
        return y + b_ref[l]

    x_out = jax.lax.fori_loop(0, L, level_body, x0, unroll=True)
    o_ref[...] = x_out.astype(o_ref.dtype)


def _pick_row_tile(rows, max_tile=512):
    """Row tile: multiple of 8, >=2 grid steps when there is enough work."""
    if rows >= 16:
        t = min(max_tile, max(8, (rows // 2) // 8 * 8))
    else:
        t = ((rows + 7) // 8) * 8          # single (padded) tile
    return max(t, 8)


def hierarchical_moe(x, weights, biases, *, max_rows_per_tile=512):
    """x: (M, H) f32; weights: (L, E, H_out, H_in); biases: (L, E, H_out)."""
    M, H = x.shape
    L, E, H_out, H_in = weights.shape
    assert H_out == H and H_in == H, "experts must be square Linear(H, H)"

    # ---- Fold the expert mean into the weights (mean of affine maps). ----
    w_bar = jnp.mean(weights, axis=1)              # (L, H, H)  (out, in)
    b_bar = jnp.mean(biases, axis=1)               # (L, H)
    w_t = jnp.swapaxes(w_bar, 1, 2)                # (L, H_in, H_out): y = x @ w_t

    # ---- Lane packing: put P = 128/H tokens per 128-lane row. ----
    if H < 128 and 128 % H == 0:
        P = 128 // H
    else:
        P = 1
    PH = P * H

    if P > 1:
        eye = jnp.eye(P, dtype=w_t.dtype)
        # Block-diagonal (PH, PH): P copies of W_bar^T on the diagonal.
        w_pack = jax.vmap(lambda w: jnp.kron(eye, w))(w_t)        # (L, PH, PH)
        b_pack = jnp.tile(b_bar, (1, P)).reshape(L, 1, PH)        # (L, 1, PH)
    else:
        w_pack = w_t                                              # (L, H, H)
        b_pack = b_bar.reshape(L, 1, PH)

    # ---- Pack tokens into lane-dense rows (pure reshapes + zero padding). ----
    pad_tok = (-M) % P
    x_p = jnp.pad(x, ((0, pad_tok), (0, 0))) if pad_tok else x
    rows = (M + pad_tok) // P
    x_rows = x_p.reshape(rows, PH)

    tm = _pick_row_tile(rows, max_rows_per_tile)
    pad_rows = (-rows) % tm
    if pad_rows:
        x_rows = jnp.pad(x_rows, ((0, pad_rows), (0, 0)))
    rows_p = rows + pad_rows
    grid = (rows_p // tm,)

    # ---- Explicit VMEM budget: 2x(in+out tile) + 2x folded weights + slack. ----
    io_bytes = tm * PH * 4
    weight_bytes = L * PH * PH * 4 + L * PH * 4
    vmem_limit = int(min(max(4 * io_bytes + 2 * weight_bytes + (2 << 20),
                             8 << 20), 48 << 20))

    out_rows = pl.pallas_call(
        hmoe_kernel,
        out_shape=jax.ShapeDtypeStruct((rows_p, PH), x.dtype),
        grid_spec=pltpu.PrefetchScalarGridSpec(
            num_scalar_prefetch=0,
            grid=grid,
            in_specs=[
                pl.BlockSpec((tm, PH), lambda i: (i, 0)),
                # Full-extent: all folded level weights resident in VMEM.
                pl.BlockSpec((L, PH, PH), lambda i: (0, 0, 0)),
                pl.BlockSpec((L, 1, PH), lambda i: (0, 0, 0)),
            ],
            out_specs=pl.BlockSpec((tm, PH), lambda i: (i, 0)),
        ),
        compiler_params=pltpu.CompilerParams(
            dimension_semantics=("parallel",),
            vmem_limit_bytes=vmem_limit),
    )(x_rows, w_pack, b_pack)

    # Undo row padding and lane packing (pure slices / reshapes).
    out = out_rows[:rows].reshape(rows * P, H)[:M]
    return out


def reference_forward(x, weights, biases):
    """Pure-JAX reference matching the PyTorch semantics exactly."""
    L, E, _, _ = weights.shape
    for l in range(L):
        outs = []
        for e in range(E):
            outs.append(x @ weights[l, e].T + biases[l, e])
        x = jnp.stack(outs).mean(0)
    return x


if __name__ == "__main__":
    # Module config (small shapes consistent with the forward).
    hidden_size = 32
    num_experts = 4
    num_levels = 2
    batch, seq = 2, 8

    key = jax.random.PRNGKey(0)
    k_x, k_w, k_b = jax.random.split(key, 3)

    # Deterministic parameter init (PyTorch Linear-style uniform +-1/sqrt(H)).
    bound = 1.0 / math.sqrt(hidden_size)
    weights = jax.random.uniform(
        k_w, (num_levels, num_experts, hidden_size, hidden_size),
        minval=-bound, maxval=bound, dtype=jnp.float32)
    biases = jax.random.uniform(
        k_b, (num_levels, num_experts, hidden_size),
        minval=-bound, maxval=bound, dtype=jnp.float32)

    x = jax.random.normal(k_x, (batch, seq, hidden_size), dtype=jnp.float32)
    x2d = x.reshape(batch * seq, hidden_size)

    out = hierarchical_moe(x2d, weights, biases)
    out = jax.block_until_ready(out)

    ref = reference_forward(x2d, weights, biases)
    assert out.shape == (batch * seq, hidden_size)
    assert jnp.allclose(out, ref, atol=1e-4, rtol=1e-4), "mismatch vs reference"

    # Reshape back to (B, S, H) to mirror the module's output shape.
    out_bsh = out.reshape(batch, seq, hidden_size)
    jax.block_until_ready(out_bsh)
    print("KERNEL_OK")
</pallas_src>

<mosaic_0001>
module attributes {stable_mosaic.version = 11 : i64} {
  func.func @hmoe_kernel(%arg0: i32, %arg1: memref<8x128xf32, #tpu.memory_space<vmem>>, %arg2: memref<2x128x128xf32, #tpu.memory_space<vmem>>, %arg3: memref<2x1x128xf32, #tpu.memory_space<vmem>>, %arg4: memref<8x128xf32, #tpu.memory_space<vmem>>) attributes {dimension_semantics = [#tpu.dimension_semantics<parallel>], iteration_bounds = array<i64: 1>, scalar_prefetch = 0 : i64, scratch_operands = 0 : i64, tpu.core_type = #tpu.core_type<tc>, window_params = [{transform_indices = @transform_0, window_bounds = array<i64: 8, 128>}, {pipeline_mode = #tpu.pipeline_mode<synchronous>, transform_indices = @transform_1, window_bounds = array<i64: 2, 128, 128>}, {pipeline_mode = #tpu.pipeline_mode<synchronous>, transform_indices = @transform_2, window_bounds = array<i64: 2, 1, 128>}, {transform_indices = @transform_3, window_bounds = array<i64: 8, 128>}]} {
    %c0 = arith.constant 0 : index
    %c0_0 = arith.constant 0 : index
    %0 = vector.load %arg1[%c0, %c0_0] : memref<8x128xf32, #tpu.memory_space<vmem>>, vector<8x128xf32>
    %c0_i32 = arith.constant 0 : i32
    %1 = arith.index_cast %c0_i32 : i32 to index
    %c0_1 = arith.constant 0 : index
    %c0_2 = arith.constant 0 : index
    %2 = vector.load %arg2[%1, %c0_1, %c0_2] : memref<2x128x128xf32, #tpu.memory_space<vmem>>, vector<1x128x128xf32>
    %3 = vector.shape_cast %2 : vector<1x128x128xf32> to vector<128x128xf32>
    %cst = arith.constant dense<0.000000e+00> : vector<8x128xf32>
    %4 = tpu.matmul %0, %3, %cst {dimension_numbers = #tpu.dot_dimension_numbers<[1], [0], [0], [1], [0, 0, 1, 1], [], []>} : vector<8x128xf32>, vector<128x128xf32>, vector<8x128xf32> -> vector<8x128xf32>
    %5 = arith.index_cast %c0_i32 : i32 to index
    %c0_3 = arith.constant 0 : index
    %c0_4 = arith.constant 0 : index
    %6 = vector.load %arg3[%5, %c0_3, %c0_4] : memref<2x1x128xf32, #tpu.memory_space<vmem>>, vector<1x1x128xf32>
    %7 = vector.shape_cast %6 : vector<1x1x128xf32> to vector<1x128xf32>
    %8 = vector.broadcast %7 : vector<1x128xf32> to vector<8x128xf32>
    %9 = arith.addf %4, %8 : vector<8x128xf32>
    %c1_i32 = arith.constant 1 : i32
    %10 = arith.index_cast %c1_i32 : i32 to index
    %c0_5 = arith.constant 0 : index
    %c0_6 = arith.constant 0 : index
    %11 = vector.load %arg2[%10, %c0_5, %c0_6] : memref<2x128x128xf32, #tpu.memory_space<vmem>>, vector<1x128x128xf32>
    %12 = vector.shape_cast %11 : vector<1x128x128xf32> to vector<128x128xf32>
    %cst_7 = arith.constant dense<0.000000e+00> : vector<8x128xf32>
    %13 = tpu.matmul %9, %12, %cst_7 {dimension_numbers = #tpu.dot_dimension_numbers<[1], [0], [0], [1], [0, 0, 1, 1], [], []>} : vector<8x128xf32>, vector<128x128xf32>, vector<8x128xf32> -> vector<8x128xf32>
    %14 = arith.index_cast %c1_i32 : i32 to index
    %c0_8 = arith.constant 0 : index
    %c0_9 = arith.constant 0 : index
    %15 = vector.load %arg3[%14, %c0_8, %c0_9] : memref<2x1x128xf32, #tpu.memory_space<vmem>>, vector<1x1x128xf32>
    %16 = vector.shape_cast %15 : vector<1x1x128xf32> to vector<1x128xf32>
    %17 = vector.broadcast %16 : vector<1x128xf32> to vector<8x128xf32>
    %18 = arith.addf %13, %17 : vector<8x128xf32>
    %c2_i32 = arith.constant 2 : i32
    %c0_10 = arith.constant 0 : index
    %c0_11 = arith.constant 0 : index
    %19 = vector.load %arg4[%c0_10, %c0_11] : memref<8x128xf32, #tpu.memory_space<vmem>>, vector<8x128xf32>
    tpu.vector_store %arg4[%c0_10, %c0_11], %18 {strides = array<i32>} : memref<8x128xf32, #tpu.memory_space<vmem>>, vector<8x128xf32>,
    return
  }
  func.func @transform_0(%arg0: i32) -> (i32, i32) {
    %c0_i32 = arith.constant 0 : i32
    %c0_i32_0 = arith.constant 0 : i32
    return %arg0, %c0_i32 : i32, i32
  }
  func.func @transform_1(%arg0: i32) -> (i32, i32, i32) {
    %c0_i32 = arith.constant 0 : i32
    %c0_i32_0 = arith.constant 0 : i32
    %c0_i32_1 = arith.constant 0 : i32
    %c0_i32_2 = arith.constant 0 : i32
    return %c0_i32, %c0_i32_0, %c0_i32_1 : i32, i32, i32
  }
  func.func @transform_2(%arg0: i32) -> (i32, i32, i32) {
    %c0_i32 = arith.constant 0 : i32
    %c0_i32_0 = arith.constant 0 : i32
    %c0_i32_1 = arith.constant 0 : i32
    %c0_i32_2 = arith.constant 0 : i32
    return %c0_i32, %c0_i32_0, %c0_i32_1 : i32, i32, i32
  }
  func.func @transform_3(%arg0: i32) -> (i32, i32) {
    %c0_i32 = arith.constant 0 : i32
    %c0_i32_0 = arith.constant 0 : i32
    return %arg0, %c0_i32 : i32, i32
  }
}

</mosaic_0001>

<llo_original>
// kernel: tpu_custom_call.1
$region0: #{tpu_custom_call.1}
  #allocation0 [shape = 'u32[]', space=smem, size = 0x4, offset = 0x4, fixed_abs, tag = 'smem constant byte address 0x4 - core index']
  #allocation1 [shape = 'u32[144,128]{1,0:T(1,128)}', space=vmem, size = 0x12000, scoped, tag = 'internal scratch']
  %s0 = inlined_call_operand.hbm [shape: f32[8,128], index: 0, kind: input, shape index: {}]
  %s1 = inlined_call_operand.hbm [shape: f32[2,128,128], index: 1, kind: input, shape index: {}]
  %s2 = inlined_call_operand.vmem [shape: f32[2,1,128], index: 2, kind: input, shape index: {}]
  %s3 = inlined_call_operand.hbm [shape: f32[8,128], index: 3, kind: output, shape index: {}]
  %s4 = sld [smem:[#allocation0]]
  $region30: #{tpu_custom_call.1} parent=0
    _
  %s6 = ssub.s32 1, %s4
  %s7 = scalar_select 0, %s6, %s4
  $region1: #{tpu_custom_call.1} parent=0
    #allocation2 [shape = 'u8[4096]{0}', space=vmem, size = 0x1000, scoped, tag = 'input window, operand 0, single buffered']
    #allocation3 [shape = 's32[1]{0}', space=sflag, size = 0x4, scoped, tag = 'scoped memory for tpu_custom_call.1']
    #allocation4 [shape = 's32[1]{0}', space=sflag, size = 0x4, scoped, tag = 'scoped memory for tpu_custom_call.1']
    #allocation5 [shape = 'u8[131072]{0}', space=vmem, size = 0x20000, scoped, tag = 'input window, operand 1, single buffered']
    #allocation6 [shape = 's32[1]{0}', space=sflag, size = 0x4, scoped, tag = 'scoped memory for tpu_custom_call.1']
    #allocation7 [shape = 'u8[4096]{0}', space=vmem, size = 0x1000, scoped, tag = 'output window, operand 0, single buffered']
    %8 = vsyncpa [#allocation3], 0
    %9 = vsyncpa [#allocation6], 0
    %10 = vsyncpa [#allocation4], 0
    // Predicated region
    $region2: #{tpu_custom_call.1} parent=1 // pred_check
      _
    $region3: #{tpu_custom_call.1} parent=1 // pred_check_branch
      %12 = sbr.rel (0) target = $region5
    $region4: #{tpu_custom_call.1} parent=1 // pred_region
      %s14 = ssub.s32 128, 128
      %15 = vsyncadd [#allocation3], %s14
      %s17 = sshll.u32 [#allocation2], 4
      %s18 = int_to_ptr.vmem [resolvable:$true] %s17
      %20 = dma.hbm_to_vmem [thread:$0]  %s0, 128, %s18, [#allocation3]
    $region5: #{tpu_custom_call.1} parent=1 // pred_fallthru
      _
    // Predicated region
    $region6: #{tpu_custom_call.1} parent=1 // pred_check
      _
    $region7: #{tpu_custom_call.1} parent=1 // pred_check_branch
      %22 = sbr.rel (0) target = $region9
    $region8: #{tpu_custom_call.1} parent=1 // pred_region
      %s24 = ssub.s32 4096, 4096
      %25 = vsyncadd [#allocation6], %s24
      %s26 = sshll.u32 [#allocation5], 4
      %s27 = int_to_ptr.vmem [resolvable:$true] %s26
      %32 = dma.hbm_to_vmem [thread:$0]  %s1, 4096, %s27, [#allocation6], 128, 128, 8
    $region9: #{tpu_custom_call.1} parent=1 // pred_fallthru
      _
    // Predicated region
    $region10: #{tpu_custom_call.1} parent=1 // pred_check
      _
    $region11: #{tpu_custom_call.1} parent=1 // pred_check_branch
      %34 = sbr.rel (0) target = $region13
    $region12: #{tpu_custom_call.1} parent=1 // pred_region
      _
    $region13: #{tpu_custom_call.1} parent=1 // pred_fallthru
      _
    // Predicated region
    $region14: #{tpu_custom_call.1} parent=1 // pred_check
      _
    $region15: #{tpu_custom_call.1} parent=1 // pred_check_branch
      %36 = sbr.rel (0) target = $region17
    $region16: #{tpu_custom_call.1} parent=1 // pred_region
      %37 = dma.done [#allocation3], 128
    $region17: #{tpu_custom_call.1} parent=1 // pred_fallthru
      _
    // Predicated region
    $region18: #{tpu_custom_call.1} parent=1 // pred_check
      _
    $region19: #{tpu_custom_call.1} parent=1 // pred_check_branch
      %39 = sbr.rel (0) target = $region21
    $region20: #{tpu_custom_call.1} parent=1 // pred_region
      %40 = dma.done [#allocation6], 4096
    $region21: #{tpu_custom_call.1} parent=1 // pred_fallthru
      _
    %v41 = vld [vmem:[#allocation2] sm:$0xff]
    %v42 = vld [vmem:[#allocation5] sm:$0xff]
    %v43 = vld [vmem:[#allocation5 + $0x8] sm:$0xff]
    %v44 = vld [vmem:[#allocation5 + $0x10] sm:$0xff]
    %v45 = vld [vmem:[#allocation5 + $0x18] sm:$0xff]
    %v46 = vld [vmem:[#allocation5 + $0x20] sm:$0xff]
    %v47 = vld [vmem:[#allocation5 + $0x28] sm:$0xff]
    %v48 = vld [vmem:[#allocation5 + $0x30] sm:$0xff]
    %v49 = vld [vmem:[#allocation5 + $0x38] sm:$0xff]
    %v50 = vld [vmem:[#allocation5 + $0x40] sm:$0xff]
    %v51 = vld [vmem:[#allocation5 + $0x48] sm:$0xff]
    %v52 = vld [vmem:[#allocation5 + $0x50] sm:$0xff]
    %v53 = vld [vmem:[#allocation5 + $0x58] sm:$0xff]
    %v54 = vld [vmem:[#allocation5 + $0x60] sm:$0xff]
    %v55 = vld [vmem:[#allocation5 + $0x68] sm:$0xff]
    %v56 = vld [vmem:[#allocation5 + $0x70] sm:$0xff]
    %v57 = vld [vmem:[#allocation5 + $0x78] sm:$0xff]
    %v58 = vld [vmem:[%s2] sm:$0x1]
    %v60 = vlaneseq
    %v61 = vshrl.u32 %v60, 7
    %v62 = vsub.s32 0, %v61
    %v63 = vrot.slane %v58, %v62
    %65 = vmatprep.subr.mxu0 0.0
    %66 = vmatpush1.msra.mxu0 %v42
    %67 = vmatprep.subr.mxu0 0.0
    %68 = vmatpush1.msra.mxu0 %v43
    %69 = vmatprep.subr.mxu0 0.0
    %70 = vmatpush1.msra.mxu0 %v44
    %71 = vmatprep.subr.mxu0 0.0
    %72 = vmatpush1.msra.mxu0 %v45
    %73 = vmatprep.subr.mxu0 0.0
    %74 = vmatpush1.msra.mxu0 %v46
    %75 = vmatprep.subr.mxu0 0.0
    %76 = vmatpush1.msra.mxu0 %v47
    %77 = vmatprep.subr.mxu0 0.0
    %78 = vmatpush1.msra.mxu0 %v48
    %79 = vmatprep.subr.mxu0 0.0
    %80 = vmatpush1.msra.mxu0 %v49
    %81 = vmatprep.subr.mxu0 0.0
    %82 = vmatpush1.msra.mxu0 %v50
    %83 = vmatprep.subr.mxu0 0.0
    %84 = vmatpush1.msra.mxu0 %v51
    %85 = vmatprep.subr.mxu0 0.0
    %86 = vmatpush1.msra.mxu0 %v52
    %87 = vmatprep.subr.mxu0 0.0
    %88 = vmatpush1.msra.mxu0 %v53
    %89 = vmatprep.subr.mxu0 0.0
    %90 = vmatpush1.msra.mxu0 %v54
    %91 = vmatprep.subr.mxu0 0.0
    %92 = vmatpush1.msra.mxu0 %v55
    %93 = vmatprep.subr.mxu0 0.0
    %94 = vmatpush1.msra.mxu0 %v56
    %95 = vmatprep.subr.mxu0 0.0
    %96 = vmatpush1.msra.mxu0 %v57
    %97 = vmatprep.subr.mxu0 0.0
    %98 = vmatpush1.msra.mxu0 0.0
    %99 = vmatprep.subr.mxu0 0.0
    %100 = vmatpush1.msra.mxu0 0.0
    %101 = vmatprep.subr.mxu0 0.0
    %102 = vmatpush1.msra.mxu0 0.0
    %103 = vmatprep.subr.mxu0 0.0
    %104 = vmatpush1.msra.mxu0 0.0
    %105 = vmatprep.subr.mxu0 0.0
    %106 = vmatpush1.msra.mxu0 0.0
    %107 = vmatprep.subr.mxu0 0.0
    %108 = vmatpush1.msra.mxu0 0.0
    %109 = vmatprep.subr.mxu0 0.0
    %110 = vmatpush1.msra.mxu0 0.0
    %111 = vmatprep.subr.mxu0 0.0
    %112 = vmatpush1.msra.mxu0 0.0
    %113 = vmatprep.subr.mxu0 0.0
    %114 = vmatpush1.msra.mxu0 0.0
    %115 = vmatprep.subr.mxu0 0.0
    %116 = vmatpush1.msra.mxu0 0.0
    %117 = vmatprep.subr.mxu0 0.0
    %118 = vmatpush1.msra.mxu0 0.0
    %119 = vmatprep.subr.mxu0 0.0
    %120 = vmatpush1.msra.mxu0 0.0
    %121 = vmatprep.subr.mxu0 0.0
    %122 = vmatpush1.msra.mxu0 0.0
    %123 = vmatprep.subr.mxu0 0.0
    %124 = vmatpush1.msra.mxu0 0.0
    %125 = vmatprep.subr.mxu0 0.0
    %126 = vmatpush1.msra.mxu0 0.0
    %127 = vmatprep.subr.mxu0 0.0
    %128 = vmatpush1.msra.mxu0 0.0
    %129 = vmatprep.mubr.f32.mxu0 0.0
    %130 = vmatmul.mubr.f32.gmra.mrb[0].mxu0 %v41
    %v131 = vpop.f32.mrb[0].mxu0
    %v132 = vadd.f32 %v63, %v131
    %v133 = vpop.f32.mrb[0].mxu0
    %134 = vdwg.mxu0
    %s135 = scalar_lea.vmem [#allocation5], 128
    %v136 = vld [vmem:[%s135] sm:$0xff]
    %v137 = vld [vmem:[%s135 + $0x8] sm:$0xff]
    %v138 = vld [vmem:[%s135 + $0x10] sm:$0xff]
    %v139 = vld [vmem:[%s135 + $0x18] sm:$0xff]
    %v140 = vld [vmem:[%s135 + $0x20] sm:$0xff]
    %v141 = vld [vmem:[%s135 + $0x28] sm:$0xff]
    %v142 = vld [vmem:[%s135 + $0x30] sm:$0xff]
    %v143 = vld [vmem:[%s135 + $0x38] sm:$0xff]
    %v144 = vld [vmem:[%s135 + $0x40] sm:$0xff]
    %v145 = vld [vmem:[%s135 + $0x48] sm:$0xff]
    %v146 = vld [vmem:[%s135 + $0x50] sm:$0xff]
    %v147 = vld [vmem:[%s135 + $0x58] sm:$0xff]
    %v148 = vld [vmem:[%s135 + $0x60] sm:$0xff]
    %v149 = vld [vmem:[%s135 + $0x68] sm:$0xff]
    %v150 = vld [vmem:[%s135 + $0x70] sm:$0xff]
    %v151 = vld [vmem:[%s135 + $0x78] sm:$0xff]
    %s152 = scalar_lea.vmem %s2, 1
    %v153 = vld [vmem:[%s152] sm:$0x1]
    %v155 = vlaneseq
    %v156 = vshrl.u32 %v155, 7
    %v157 = vsub.s32 0, %v156
    %v158 = vrot.slane %v153, %v157
    %160 = vmatprep.subr.mxu0 0.0
    %161 = vmatpush1.msra.mxu0 %v136
    %162 = vmatprep.subr.mxu0 0.0
    %163 = vmatpush1.msra.mxu0 %v137
    %164 = vmatprep.subr.mxu0 0.0
    %165 = vmatpush1.msra.mxu0 %v138
    %166 = vmatprep.subr.mxu0 0.0
    %167 = vmatpush1.msra.mxu0 %v139
    %168 = vmatprep.subr.mxu0 0.0
    %169 = vmatpush1.msra.mxu0 %v140
    %170 = vmatprep.subr.mxu0 0.0
    %171 = vmatpush1.msra.mxu0 %v141
    %172 = vmatprep.subr.mxu0 0.0
    %173 = vmatpush1.msra.mxu0 %v142
    %174 = vmatprep.subr.mxu0 0.0
    %175 = vmatpush1.msra.mxu0 %v143
    %176 = vmatprep.subr.mxu0 0.0
    %177 = vmatpush1.msra.mxu0 %v144
    %178 = vmatprep.subr.mxu0 0.0
    %179 = vmatpush1.msra.mxu0 %v145
    %180 = vmatprep.subr.mxu0 0.0
    %181 = vmatpush1.msra.mxu0 %v146
    %182 = vmatprep.subr.mxu0 0.0
    %183 = vmatpush1.msra.mxu0 %v147
    %184 = vmatprep.subr.mxu0 0.0
    %185 = vmatpush1.msra.mxu0 %v148
    %186 = vmatprep.subr.mxu0 0.0
    %187 = vmatpush1.msra.mxu0 %v149
    %188 = vmatprep.subr.mxu0 0.0
    %189 = vmatpush1.msra.mxu0 %v150
    %190 = vmatprep.subr.mxu0 0.0
    %191 = vmatpush1.msra.mxu0 %v151
    %192 = vmatprep.subr.mxu0 0.0
    %193 = vmatpush1.msra.mxu0 0.0
    %194 = vmatprep.subr.mxu0 0.0
    %195 = vmatpush1.msra.mxu0 0.0
    %196 = vmatprep.subr.mxu0 0.0
    %197 = vmatpush1.msra.mxu0 0.0
    %198 = vmatprep.subr.mxu0 0.0
    %199 = vmatpush1.msra.mxu0 0.0
    %200 = vmatprep.subr.mxu0 0.0
    %201 = vmatpush1.msra.mxu0 0.0
    %202 = vmatprep.subr.mxu0 0.0
    %203 = vmatpush1.msra.mxu0 0.0
    %204 = vmatprep.subr.mxu0 0.0
    %205 = vmatpush1.msra.mxu0 0.0
    %206 = vmatprep.subr.mxu0 0.0
    %207 = vmatpush1.msra.mxu0 0.0
    %208 = vmatprep.subr.mxu0 0.0
    %209 = vmatpush1.msra.mxu0 0.0
    %210 = vmatprep.subr.mxu0 0.0
    %211 = vmatpush1.msra.mxu0 0.0
    %212 = vmatprep.subr.mxu0 0.0
    %213 = vmatpush1.msra.mxu0 0.0
    %214 = vmatprep.subr.mxu0 0.0
    %215 = vmatpush1.msra.mxu0 0.0
    %216 = vmatprep.subr.mxu0 0.0
    %217 = vmatpush1.msra.mxu0 0.0
    %218 = vmatprep.subr.mxu0 0.0
    %219 = vmatpush1.msra.mxu0 0.0
    %220 = vmatprep.subr.mxu0 0.0
    %221 = vmatpush1.msra.mxu0 0.0
    %222 = vmatprep.subr.mxu0 0.0
    %223 = vmatpush1.msra.mxu0 0.0
    %224 = vmatprep.mubr.f32.mxu0 0.0
    %225 = vmatmul.mubr.f32.gmra.mrb[0].mxu0 %v132
    %v226 = vpop.f32.mrb[0].mxu0
    %v227 = vadd.f32 %v158, %v226
    %v228 = vpop.f32.mrb[0].mxu0
    %229 = vdwg.mxu0
    %230 = vst [vmem:[#allocation7] sm:$0xff] %v227
    // Predicated region
    $region22: #{tpu_custom_call.1} parent=1 // pred_check
      _
    $region23: #{tpu_custom_call.1} parent=1 // pred_check_branch
      %232 = sbr.rel (0) target = $region25
    $region24: #{tpu_custom_call.1} parent=1 // pred_region
      %s234 = ssub.s32 128, 128
      %235 = vsyncadd [#allocation4], %s234
      %s237 = sshll.u32 [#allocation7], 4
      %s238 = int_to_ptr.vmem [resolvable:$true] %s237
      %240 = dma.vmem_to_hbm [thread:$0]  %s238, 128, %s3, [#allocation4]
    $region25: #{tpu_custom_call.1} parent=1 // pred_fallthru
      _
    // Predicated region
    $region26: #{tpu_custom_call.1} parent=1 // pred_check
      _
    $region27: #{tpu_custom_call.1} parent=1 // pred_check_branch
      %242 = sbr.rel (0) target = $region29
    $region28: #{tpu_custom_call.1} parent=1 // pred_region
      %243 = dma.done [#allocation4], 128
    $region29: #{tpu_custom_call.1} parent=1 // pred_fallthru
      _
    %244 = vsyncpa [#allocation3], 1
    %245 = vsyncpa [#allocation6], 1
    %246 = vsyncpa [#allocation4], 1

</llo_original>
